<compile_context>
chip_gen: v7x
topology: tpu7x:2x2x1
jax: 0.10.0
libtpu: 0.0.40
codegen_flags: <defaults>
</compile_context>

<pallas_src>
import functools

import jax
import jax.numpy as jnp
from jax import lax
from jax.experimental import pallas as pl
from jax.experimental.pallas import tpu as pltpu


def _round_up(a: int, b: int) -> int:
    return ((a + b - 1) // b) * b


def _cdiv(a: int, b: int) -> int:
    return (a + b - 1) // b


# (tm, tk) x (tn, tk) -> (tm, tn): contract the K axis of both operands (x · Wᵀ).
_CONTRACT_K = (((1,), (1,)), ((), ()))


def _linear_kernel_single(x_ref, w_ref, b_ref, o_ref):
    """Single K step: no scratch, no init/finalize branches."""
    out = lax.dot_general(x_ref[...], w_ref[...], _CONTRACT_K,
                          preferred_element_type=jnp.float32)
    o_ref[...] = (out + b_ref[...].astype(jnp.float32)).astype(o_ref.dtype)


def _linear_kernel_f32_inplace(x_ref, w_ref, b_ref, o_ref):
    """Multi K step, f32 output: accumulate directly in the resident output block."""
    k = pl.program_id(2)

    @pl.when(k == 0)
    def _():
        o_ref[...] = jnp.zeros_like(o_ref)

    o_ref[...] += lax.dot_general(x_ref[...], w_ref[...], _CONTRACT_K,
                                  preferred_element_type=jnp.float32)

    @pl.when(k == pl.num_programs(2) - 1)
    def _():
        o_ref[...] += b_ref[...].astype(o_ref.dtype)


def _linear_kernel_acc(x_ref, w_ref, b_ref, o_ref, acc_ref):
    """Multi K step, generic output dtype: f32 VMEM accumulator scratch."""
    k = pl.program_id(2)

    @pl.when(k == 0)
    def _():
        acc_ref[...] = jnp.zeros_like(acc_ref)

    acc_ref[...] += lax.dot_general(x_ref[...], w_ref[...], _CONTRACT_K,
                                    preferred_element_type=jnp.float32)

    @pl.when(k == pl.num_programs(2) - 1)
    def _():
        o_ref[...] = (acc_ref[...]
                      + b_ref[...].astype(jnp.float32)).astype(o_ref.dtype)


@functools.partial(jax.jit, static_argnames=("compute_dtype",))
def linear_net_forward(x, weight, bias, compute_dtype=None):
    """Forward pass of LinearNet.

    x:      (B, ...) -- flattened to (B, input_size)
    weight: (num_classes, input_size)   (PyTorch nn.Linear convention)
    bias:   (num_classes,)
    compute_dtype: optional matmul-operand dtype (e.g. jnp.bfloat16);
                   accumulation stays f32, output keeps x's dtype.
    returns (B, num_classes)
    """
    B = x.shape[0]
    x2 = x.reshape(B, -1)                       # x.view(x.size(0), -1)
    K = x2.shape[1]
    N = weight.shape[0]
    assert weight.shape == (N, K)
    out_dtype = x2.dtype

    w = weight
    if compute_dtype is not None:
        x2 = x2.astype(compute_dtype)
        w = w.astype(compute_dtype)
    in_itemsize = jnp.dtype(x2.dtype).itemsize
    out_itemsize = jnp.dtype(out_dtype).itemsize

    # ---------------- tile selection ----------------
    # K: the only dim that MUST be zero-padded (a ragged K tail would accumulate
    # garbage into valid outputs).  Pad to a lane multiple, then pick the largest
    # tk (cap 2048) that tiles it with minimal over-pad.
    TK_CAP = 2048
    K128 = _round_up(K, 128)
    nk = _cdiv(K128, TK_CAP)
    tk = _round_up(_cdiv(K128, nk), 128)
    K_pad = nk * tk

    # N: small / unaligned heads use the full-extent block (no HBM padding of the
    # weight stream).  Lane-aligned N gets tiled; only large unaligned N pads.
    if N % 128 == 0:
        tn = 256 if N % 256 == 0 else 128
        N_pad = N
    elif N > 512:
        N_pad = _round_up(N, 128)
        tn = 128
    else:
        tn = N
        N_pad = N
    grid_j = N_pad // tn

    # B: no HBM padding; Pallas masks the ragged last row-block.  Larger tm cuts
    # weight re-streaming (weight HBM bytes ~ cdiv(B, tm) * N * K).
    TM_CAP = 256
    tm = min(TM_CAP, _round_up(B, 8))
    if grid_j == 1 and B >= 16 and _cdiv(B, tm) < 2:
        # Give v7x's second TensorCore an i-tile to shard over.
        tm = max(8, _round_up(_cdiv(B, 2), 8))
    grid_i = _cdiv(B, tm)

    grid = (grid_i, grid_j, nk)

    # ---------------- zero-pad K (and N only when tiled-padded) ----------------
    pad_k = K_pad - K
    pad_n = N_pad - N
    if pad_k:
        x2 = jnp.pad(x2, ((0, 0), (0, pad_k)))
    if pad_k or pad_n:
        w = jnp.pad(w, ((0, pad_n), (0, pad_k)))
    b2 = bias.reshape(1, N)
    if pad_n:
        b2 = jnp.pad(b2, ((0, 0), (0, pad_n)))

    # ---------------- kernel selection ----------------
    if nk == 1:
        kernel = _linear_kernel_single
        scratch = []
    elif out_dtype == jnp.float32:
        kernel = _linear_kernel_f32_inplace
        scratch = []
    else:
        kernel = _linear_kernel_acc
        scratch = [pltpu.VMEM((tm, tn), jnp.float32)]

    cost = pl.CostEstimate(
        flops=2 * B * K_pad * N_pad,
        bytes_accessed=(B * K_pad * in_itemsize               # activations
                        + grid_i * N_pad * K_pad * in_itemsize  # weight, re-streamed per i-tile
                        + B * N_pad * out_itemsize),           # output
        transcendentals=0,
    )

    out = pl.pallas_call(
        kernel,
        out_shape=jax.ShapeDtypeStruct((B, N_pad), out_dtype),
        grid_spec=pltpu.PrefetchScalarGridSpec(
            num_scalar_prefetch=0,
            grid=grid,
            in_specs=[
                pl.BlockSpec((tm, tk), lambda i, j, k: (i, k)),   # x (B, K_pad)
                pl.BlockSpec((tn, tk), lambda i, j, k: (j, k)),   # weight (N_pad, K_pad)
                pl.BlockSpec((1, tn), lambda i, j, k: (0, j)),    # bias (1, N_pad)
            ],
            out_specs=pl.BlockSpec((tm, tn), lambda i, j, k: (i, j)),
            scratch_shapes=scratch,
        ),
        compiler_params=pltpu.CompilerParams(
            dimension_semantics=("parallel", "parallel", "arbitrary"),
            vmem_limit_bytes=32 * 1024 * 1024,  # footprint <= ~9 MiB even at max tiles (v7x-safe)
        ),
        cost_estimate=cost,
    )(x2, w, b2)

    return out[:, :N] if pad_n else out


def init_linear_params(key, input_size, num_classes, dtype=jnp.float32):
    """Deterministic init matching nn.Linear's default U(-1/sqrt(fan_in), ...)."""
    kw, kb = jax.random.split(key)
    bound = 1.0 / (input_size ** 0.5)
    weight = jax.random.uniform(kw, (num_classes, input_size), dtype,
                                minval=-bound, maxval=bound)
    bias = jax.random.uniform(kb, (num_classes,), dtype,
                              minval=-bound, maxval=bound)
    return weight, bias


if __name__ == "__main__":
    key = jax.random.PRNGKey(0)
    k_x, k_p = jax.random.split(key)

    # Small example: batch=2, channels=4, spatial=16x16 -> input_size=1024
    B, C, H, W = 2, 4, 16, 16
    input_size = C * H * W
    num_classes = 10

    x = jax.random.normal(k_x, (B, C, H, W), dtype=jnp.float32)
    weight, bias = init_linear_params(k_p, input_size, num_classes)

    y = linear_net_forward(x, weight, bias)
    jax.block_until_ready(y)

    # Reference check against plain JAX.
    y_ref = x.reshape(B, -1) @ weight.T + bias
    assert y.shape == (B, num_classes)
    assert jnp.allclose(y, y_ref, atol=1e-4, rtol=1e-5), \
        float(jnp.max(jnp.abs(y - y_ref)))

    print("KERNEL_OK")
</pallas_src>

<mosaic_0001>
module attributes {stable_mosaic.version = 11 : i64} {
  func.func @_linear_kernel_single(%arg0: i32, %arg1: i32, %arg2: i32, %arg3: memref<8x1024xf32, #tpu.memory_space<vmem>>, %arg4: memref<10x1024xf32, #tpu.memory_space<vmem>>, %arg5: memref<1x10xf32, #tpu.memory_space<vmem>>, %arg6: memref<8x10xf32, #tpu.memory_space<vmem>>) attributes {dimension_semantics = [#tpu.dimension_semantics<parallel>, #tpu.dimension_semantics<parallel>, #tpu.dimension_semantics<arbitrary>], iteration_bounds = array<i64: 1, 1, 1>, scalar_prefetch = 0 : i64, scratch_operands = 0 : i64, tpu.core_type = #tpu.core_type<tc>, window_params = [{transform_indices = @transform_0, window_bounds = array<i64: 8, 1024>}, {transform_indices = @transform_1, window_bounds = array<i64: 10, 1024>}, {transform_indices = @transform_2, window_bounds = array<i64: 1, 10>}, {transform_indices = @transform_3, window_bounds = array<i64: 8, 10>}]} {
    %c0 = arith.constant 0 : index
    %c0_0 = arith.constant 0 : index
    %0 = vector.load %arg3[%c0, %c0_0] : memref<8x1024xf32, #tpu.memory_space<vmem>>, vector<8x1024xf32>
    %c0_1 = arith.constant 0 : index
    %c0_2 = arith.constant 0 : index
    %1 = vector.load %arg4[%c0_1, %c0_2] : memref<10x1024xf32, #tpu.memory_space<vmem>>, vector<10x1024xf32>
    %cst = arith.constant dense<0.000000e+00> : vector<8x10xf32>
    %2 = tpu.matmul %0, %1, %cst {dimension_numbers = #tpu.dot_dimension_numbers<[1], [1], [0], [0], [0, 0, 1, 0], [], []>} : vector<8x1024xf32>, vector<10x1024xf32>, vector<8x10xf32> -> vector<8x10xf32>
    %c0_3 = arith.constant 0 : index
    %c0_4 = arith.constant 0 : index
    %3 = vector.load %arg5[%c0_3, %c0_4] : memref<1x10xf32, #tpu.memory_space<vmem>>, vector<1x10xf32>
    %4 = vector.broadcast %3 : vector<1x10xf32> to vector<8x10xf32>
    %5 = arith.addf %2, %4 : vector<8x10xf32>
    %c0_5 = arith.constant 0 : index
    %c0_6 = arith.constant 0 : index
    %6 = vector.load %arg6[%c0_5, %c0_6] : memref<8x10xf32, #tpu.memory_space<vmem>>, vector<8x10xf32>
    tpu.vector_store %arg6[%c0_5, %c0_6], %5 {strides = array<i32>} : memref<8x10xf32, #tpu.memory_space<vmem>>, vector<8x10xf32>,
    return
  }
  func.func @transform_0(%arg0: i32, %arg1: i32, %arg2: i32) -> (i32, i32) {
    %c0_i32 = arith.constant 0 : i32
    return %arg0, %arg2 : i32, i32
  }
  func.func @transform_1(%arg0: i32, %arg1: i32, %arg2: i32) -> (i32, i32) {
    %c0_i32 = arith.constant 0 : i32
    return %arg1, %arg2 : i32, i32
  }
  func.func @transform_2(%arg0: i32, %arg1: i32, %arg2: i32) -> (i32, i32) {
    %c0_i32 = arith.constant 0 : i32
    %c0_i32_0 = arith.constant 0 : i32
    return %c0_i32, %arg1 : i32, i32
  }
  func.func @transform_3(%arg0: i32, %arg1: i32, %arg2: i32) -> (i32, i32) {
    %c0_i32 = arith.constant 0 : i32
    return %arg0, %arg1 : i32, i32
  }
}

</mosaic_0001>

<llo_original>
// kernel: linear_net_forward.1
$region0: #{linear_net_forward.1}
  #allocation0 [shape = 'u32[]', space=smem, size = 0x4, offset = 0x4, fixed_abs, tag = 'smem constant byte address 0x4 - core index']
  #allocation1 [shape = 'u32[144,128]{1,0:T(1,128)}', space=vmem, size = 0x12000, scoped, tag = 'internal scratch']
  %s0 = inlined_call_operand.vmem [shape: f32[2,1024], index: 0, kind: input, shape index: {}]
  %s1 = inlined_call_operand.vmem [shape: f32[10,1024], index: 1, kind: input, shape index: {}]
  %s2 = inlined_call_operand.vmem [shape: f32[1,10], index: 2, kind: input, shape index: {}]
  %s3 = inlined_call_operand.hbm [shape: f32[2,10], index: 3, kind: output, shape index: {}]
  %s4 = sld [smem:[#allocation0]]
  $region22: #{linear_net_forward.1} parent=0
    _
  %s6 = ssub.s32 1, %s4
  %s7 = scalar_select 0, %s6, %s4
  $region1: #{linear_net_forward.1} parent=0
    #allocation2 [shape = 'u8[4096]{0}', space=vmem, size = 0x1000, scoped, tag = 'output window, operand 0, single buffered']
    #allocation3 [shape = 's32[1]{0}', space=sflag, size = 0x4, scoped, tag = 'scoped memory for linear_net_forward.1']
    %8 = vsyncpa [#allocation3], 0
    // Predicated region
    $region2: #{linear_net_forward.1} parent=1 // pred_check
      _
    $region3: #{linear_net_forward.1} parent=1 // pred_check_branch
      %10 = sbr.rel (0) target = $region5
    $region4: #{linear_net_forward.1} parent=1 // pred_region
      _
    $region5: #{linear_net_forward.1} parent=1 // pred_fallthru
      _
    // Predicated region
    $region6: #{linear_net_forward.1} parent=1 // pred_check
      _
    $region7: #{linear_net_forward.1} parent=1 // pred_check_branch
      %12 = sbr.rel (0) target = $region9
    $region8: #{linear_net_forward.1} parent=1 // pred_region
      _
    $region9: #{linear_net_forward.1} parent=1 // pred_fallthru
      _
    // Predicated region
    $region10: #{linear_net_forward.1} parent=1 // pred_check
      _
    $region11: #{linear_net_forward.1} parent=1 // pred_check_branch
      %14 = sbr.rel (0) target = $region13
    $region12: #{linear_net_forward.1} parent=1 // pred_region
      _
    $region13: #{linear_net_forward.1} parent=1 // pred_fallthru
      _
    %v15 = vld [vmem:[%s0] sm:$0xff]
    %v16 = vld [vmem:[%s0 + $0x8] sm:$0xff]
    %v17 = vld [vmem:[%s0 + $0x10] sm:$0xff]
    %v18 = vld [vmem:[%s0 + $0x18] sm:$0xff]
    %v19 = vld [vmem:[%s0 + $0x20] sm:$0xff]
    %v20 = vld [vmem:[%s0 + $0x28] sm:$0xff]
    %v21 = vld [vmem:[%s0 + $0x30] sm:$0xff]
    %v22 = vld [vmem:[%s0 + $0x38] sm:$0xff]
    %v23 = vld [vmem:[%s1] sm:$0xff]
    %v24 = vld [vmem:[%s1 + $0x8] sm:$0xff]
    %v25 = vld [vmem:[%s1 + $0x10] sm:$0xff]
    %v26 = vld [vmem:[%s1 + $0x18] sm:$0xff]
    %v27 = vld [vmem:[%s1 + $0x20] sm:$0xff]
    %v28 = vld [vmem:[%s1 + $0x28] sm:$0xff]
    %v29 = vld [vmem:[%s1 + $0x30] sm:$0xff]
    %v30 = vld [vmem:[%s1 + $0x38] sm:$0xff]
    %v31 = vld [vmem:[%s1 + $0x40] sm:$0x3]
    %v32 = vld [vmem:[%s1 + $0x48] sm:$0x3]
    %v33 = vld [vmem:[%s1 + $0x50] sm:$0x3]
    %v34 = vld [vmem:[%s1 + $0x58] sm:$0x3]
    %v35 = vld [vmem:[%s1 + $0x60] sm:$0x3]
    %v36 = vld [vmem:[%s1 + $0x68] sm:$0x3]
    %v37 = vld [vmem:[%s1 + $0x70] sm:$0x3]
    %v38 = vld [vmem:[%s1 + $0x78] sm:$0x3]
    %v39 = vld [vmem:[%s2] sm:$0x1]
    %v41 = vlaneseq
    %v42 = vshrl.u32 %v41, 7
    %v43 = vsub.s32 0, %v42
    %v44 = vrot.slane %v39, %v43
    %v54 = vcombine.low %v15, %v17
    %v55 = vcombine.high %v15, %v17
    %v56 = vcombine.low %v19, %v21
    %v57 = vcombine.high %v19, %v21
    %v59 = vunpack.c.l.s4 1983009808
    %v60 = vunpack.c.0.s8 %v59
    %v61 = vlaneseq
    %v62 = vshrl.u32 %v61, 7
    %v63 = vsub.s32 %v60, %v62
    %v64 = vrot.slane %v54, %v63
    %v66 = vunpack.c.l.s4 1983009808
    %v67 = vunpack.c.0.s8 %v66
    %v68 = vlaneseq
    %v69 = vshrl.u32 %v68, 7
    %v70 = vsub.s32 %v67, %v69
    %v71 = vrot.slane %v55, %v70
    %v73 = vunpack.c.l.s4 1983009808
    %v74 = vunpack.c.0.s8 %v73
    %v75 = vlaneseq
    %v76 = vshrl.u32 %v75, 7
    %v77 = vsub.s32 %v74, %v76
    %v78 = vrot.slane %v56, %v77
    %v80 = vunpack.c.l.s4 1983009808
    %v81 = vunpack.c.0.s8 %v80
    %v82 = vlaneseq
    %v83 = vshrl.u32 %v82, 7
    %v84 = vsub.s32 %v81, %v83
    %v85 = vrot.slane %v57, %v84
    %v86 = vcombine.low %v64, %v78
    %v87 = vcombine.high %v64, %v78
    %v88 = vcombine.low %v71, %v85
    %v89 = vcombine.high %v71, %v85
    %v90 = vcombine.low %v16, %v18
    %v91 = vcombine.high %v16, %v18
    %v92 = vcombine.low %v20, %v22
    %v93 = vcombine.high %v20, %v22
    %v95 = vunpack.c.l.s4 1983009808
    %v96 = vunpack.c.0.s8 %v95
    %v97 = vlaneseq
    %v98 = vshrl.u32 %v97, 7
    %v99 = vsub.s32 %v96, %v98
    %v100 = vrot.slane %v90, %v99
    %v102 = vunpack.c.l.s4 1983009808
    %v103 = vunpack.c.0.s8 %v102
    %v104 = vlaneseq
    %v105 = vshrl.u32 %v104, 7
    %v106 = vsub.s32 %v103, %v105
    %v107 = vrot.slane %v91, %v106
    %v109 = vunpack.c.l.s4 1983009808
    %v110 = vunpack.c.0.s8 %v109
    %v111 = vlaneseq
    %v112 = vshrl.u32 %v111, 7
    %v113 = vsub.s32 %v110, %v112
    %v114 = vrot.slane %v92, %v113
    %v116 = vunpack.c.l.s4 1983009808
    %v117 = vunpack.c.0.s8 %v116
    %v118 = vlaneseq
    %v119 = vshrl.u32 %v118, 7
    %v120 = vsub.s32 %v117, %v119
    %v121 = vrot.slane %v93, %v120
    %v122 = vcombine.low %v100, %v114
    %v123 = vcombine.high %v100, %v114
    %v124 = vcombine.low %v107, %v121
    %v125 = vcombine.high %v107, %v121
    %134 = vmatprep.subr.mxu0 %v24
    %135 = vmatpush1.xpose.msra.mxu0 %v23
    %136 = vmatprep.subr.mxu0 %v32
    %137 = vmatpush1.xpose.msra.mxu0 %v31
    %138 = vmatprep.subr.mxu0 0.0
    %139 = vmatpush1.xpose.msra.mxu0 0.0
    %140 = vmatprep.subr.mxu0 0.0
    %141 = vmatpush1.xpose.msra.mxu0 0.0
    %142 = vmatprep.subr.mxu0 0.0
    %143 = vmatpush1.xpose.msra.mxu0 0.0
    %144 = vmatprep.subr.mxu0 0.0
    %145 = vmatpush1.xpose.msra.mxu0 0.0
    %146 = vmatprep.subr.mxu0 0.0
    %147 = vmatpush1.xpose.msra.mxu0 0.0
    %148 = vmatprep.subr.mxu0 0.0
    %149 = vmatpush1.xpose.msra.mxu0 0.0
    %150 = vmatprep.subr.mxu0 0.0
    %151 = vmatpush1.xpose.msra.mxu0 0.0
    %152 = vmatprep.subr.mxu0 0.0
    %153 = vmatpush1.xpose.msra.mxu0 0.0
    %154 = vmatprep.subr.mxu0 0.0
    %155 = vmatpush1.xpose.msra.mxu0 0.0
    %156 = vmatprep.subr.mxu0 0.0
    %157 = vmatpush1.xpose.msra.mxu0 0.0
    %158 = vmatprep.subr.mxu0 0.0
    %159 = vmatpush1.xpose.msra.mxu0 0.0
    %160 = vmatprep.subr.mxu0 0.0
    %161 = vmatpush1.xpose.msra.mxu0 0.0
    %162 = vmatprep.subr.mxu0 0.0
    %163 = vmatpush1.xpose.msra.mxu0 0.0
    %164 = vmatprep.subr.mxu0 0.0
    %165 = vmatpush1.xpose.msra.mxu0 0.0
    %166 = vmatprep.subr.mxu0 0.0
    %167 = vmatpush1.xpose.msra.mxu0 0.0
    %168 = vmatprep.subr.mxu0 0.0
    %169 = vmatpush1.xpose.msra.mxu0 0.0
    %170 = vmatprep.subr.mxu0 0.0
    %171 = vmatpush1.xpose.msra.mxu0 0.0
    %172 = vmatprep.subr.mxu0 0.0
    %173 = vmatpush1.xpose.msra.mxu0 0.0
    %174 = vmatprep.subr.mxu0 0.0
    %175 = vmatpush1.xpose.msra.mxu0 0.0
    %176 = vmatprep.subr.mxu0 0.0
    %177 = vmatpush1.xpose.msra.mxu0 0.0
    %178 = vmatprep.subr.mxu0 0.0
    %179 = vmatpush1.xpose.msra.mxu0 0.0
    %180 = vmatprep.subr.mxu0 0.0
    %181 = vmatpush1.xpose.msra.mxu0 0.0
    %182 = vmatprep.subr.mxu0 0.0
    %183 = vmatpush1.xpose.msra.mxu0 0.0
    %184 = vmatprep.subr.mxu0 0.0
    %185 = vmatpush1.xpose.msra.mxu0 0.0
    %186 = vmatprep.subr.mxu0 0.0
    %187 = vmatpush1.xpose.msra.mxu0 0.0
    %188 = vmatprep.subr.mxu0 0.0
    %189 = vmatpush1.xpose.msra.mxu0 0.0
    %190 = vmatprep.subr.mxu0 0.0
    %191 = vmatpush1.xpose.msra.mxu0 0.0
    %192 = vmatprep.subr.mxu0 0.0
    %193 = vmatpush1.xpose.msra.mxu0 0.0
    %194 = vmatprep.subr.mxu0 0.0
    %195 = vmatpush1.xpose.msra.mxu0 0.0
    %196 = vmatprep.subr.mxu0 0.0
    %197 = vmatpush1.xpose.msra.mxu0 0.0
    %198 = vmatprep.mubr.f32.mxu0 %v87
    %199 = vmatmul.mubr.f32.gmra.mrb[0].mxu0 %v86
    %v200 = vpop.f32.mrb[0].mxu0
    %v201 = vadd.f32 %v44, %v200
    %v202 = vpop.f32.mrb[0].mxu0
    %203 = vdwg.mxu0
    %204 = vmatprep.subr.mxu0 %v26
    %205 = vmatpush1.xpose.msra.mxu0 %v25
    %206 = vmatprep.subr.mxu0 %v34
    %207 = vmatpush1.xpose.msra.mxu0 %v33
    %208 = vmatprep.subr.mxu0 0.0
    %209 = vmatpush1.xpose.msra.mxu0 0.0
    %210 = vmatprep.subr.mxu0 0.0
    %211 = vmatpush1.xpose.msra.mxu0 0.0
    %212 = vmatprep.subr.mxu0 0.0
    %213 = vmatpush1.xpose.msra.mxu0 0.0
    %214 = vmatprep.subr.mxu0 0.0
    %215 = vmatpush1.xpose.msra.mxu0 0.0
    %216 = vmatprep.subr.mxu0 0.0
    %217 = vmatpush1.xpose.msra.mxu0 0.0
    %218 = vmatprep.subr.mxu0 0.0
    %219 = vmatpush1.xpose.msra.mxu0 0.0
    %220 = vmatprep.subr.mxu0 0.0
    %221 = vmatpush1.xpose.msra.mxu0 0.0
    %222 = vmatprep.subr.mxu0 0.0
    %223 = vmatpush1.xpose.msra.mxu0 0.0
    %224 = vmatprep.subr.mxu0 0.0
    %225 = vmatpush1.xpose.msra.mxu0 0.0
    %226 = vmatprep.subr.mxu0 0.0
    %227 = vmatpush1.xpose.msra.mxu0 0.0
    %228 = vmatprep.subr.mxu0 0.0
    %229 = vmatpush1.xpose.msra.mxu0 0.0
    %230 = vmatprep.subr.mxu0 0.0
    %231 = vmatpush1.xpose.msra.mxu0 0.0
    %232 = vmatprep.subr.mxu0 0.0
    %233 = vmatpush1.xpose.msra.mxu0 0.0
    %234 = vmatprep.subr.mxu0 0.0
    %235 = vmatpush1.xpose.msra.mxu0 0.0
    %236 = vmatprep.subr.mxu0 0.0
    %237 = vmatpush1.xpose.msra.mxu0 0.0
    %238 = vmatprep.subr.mxu0 0.0
    %239 = vmatpush1.xpose.msra.mxu0 0.0
    %240 = vmatprep.subr.mxu0 0.0
    %241 = vmatpush1.xpose.msra.mxu0 0.0
    %242 = vmatprep.subr.mxu0 0.0
    %243 = vmatpush1.xpose.msra.mxu0 0.0
    %244 = vmatprep.subr.mxu0 0.0
    %245 = vmatpush1.xpose.msra.mxu0 0.0
    %246 = vmatprep.subr.mxu0 0.0
    %247 = vmatpush1.xpose.msra.mxu0 0.0
    %248 = vmatprep.subr.mxu0 0.0
    %249 = vmatpush1.xpose.msra.mxu0 0.0
    %250 = vmatprep.subr.mxu0 0.0
    %251 = vmatpush1.xpose.msra.mxu0 0.0
    %252 = vmatprep.subr.mxu0 0.0
    %253 = vmatpush1.xpose.msra.mxu0 0.0
    %254 = vmatprep.subr.mxu0 0.0
    %255 = vmatpush1.xpose.msra.mxu0 0.0
    %256 = vmatprep.subr.mxu0 0.0
    %257 = vmatpush1.xpose.msra.mxu0 0.0
    %258 = vmatprep.subr.mxu0 0.0
    %259 = vmatpush1.xpose.msra.mxu0 0.0
    %260 = vmatprep.subr.mxu0 0.0
    %261 = vmatpush1.xpose.msra.mxu0 0.0
    %262 = vmatprep.subr.mxu0 0.0
    %263 = vmatpush1.xpose.msra.mxu0 0.0
    %264 = vmatprep.subr.mxu0 0.0
    %265 = vmatpush1.xpose.msra.mxu0 0.0
    %266 = vmatprep.subr.mxu0 0.0
    %267 = vmatpush1.xpose.msra.mxu0 0.0
    %268 = vmatprep.mubr.f32.mxu0 %v89
    %269 = vmatmul.mubr.f32.gmra.mrb[0].mxu0 %v88
    %v270 = vpop.f32.mrb[0].mxu0
    %v271 = vadd.f32 %v201, %v270
    %v272 = vpop.f32.mrb[0].mxu0
    %273 = vdwg.mxu0
    %274 = vmatprep.subr.mxu0 %v28
    %275 = vmatpush1.xpose.msra.mxu0 %v27
    %276 = vmatprep.subr.mxu0 %v36
    %277 = vmatpush1.xpose.msra.mxu0 %v35
    %278 = vmatprep.subr.mxu0 0.0
    %279 = vmatpush1.xpose.msra.mxu0 0.0
    %280 = vmatprep.subr.mxu0 0.0
    %281 = vmatpush1.xpose.msra.mxu0 0.0
    %282 = vmatprep.subr.mxu0 0.0
    %283 = vmatpush1.xpose.msra.mxu0 0.0
    %284 = vmatprep.subr.mxu0 0.0
    %285 = vmatpush1.xpose.msra.mxu0 0.0
    %286 = vmatprep.subr.mxu0 0.0
    %287 = vmatpush1.xpose.msra.mxu0 0.0
    %288 = vmatprep.subr.mxu0 0.0
    %289 = vmatpush1.xpose.msra.mxu0 0.0
    %290 = vmatprep.subr.mxu0 0.0
    %291 = vmatpush1.xpose.msra.mxu0 0.0
    %292 = vmatprep.subr.mxu0 0.0
    %293 = vmatpush1.xpose.msra.mxu0 0.0
    %294 = vmatprep.subr.mxu0 0.0
    %295 = vmatpush1.xpose.msra.mxu0 0.0
    %296 = vmatprep.subr.mxu0 0.0
    %297 = vmatpush1.xpose.msra.mxu0 0.0
    %298 = vmatprep.subr.mxu0 0.0
    %299 = vmatpush1.xpose.msra.mxu0 0.0
    %300 = vmatprep.subr.mxu0 0.0
    %301 = vmatpush1.xpose.msra.mxu0 0.0
    %302 = vmatprep.subr.mxu0 0.0
    %303 = vmatpush1.xpose.msra.mxu0 0.0
    %304 = vmatprep.subr.mxu0 0.0
    %305 = vmatpush1.xpose.msra.mxu0 0.0
    %306 = vmatprep.subr.mxu0 0.0
    %307 = vmatpush1.xpose.msra.mxu0 0.0
    %308 = vmatprep.subr.mxu0 0.0
    %309 = vmatpush1.xpose.msra.mxu0 0.0
    %310 = vmatprep.subr.mxu0 0.0
    %311 = vmatpush1.xpose.msra.mxu0 0.0
    %312 = vmatprep.subr.mxu0 0.0
    %313 = vmatpush1.xpose.msra.mxu0 0.0
    %314 = vmatprep.subr.mxu0 0.0
    %315 = vmatpush1.xpose.msra.mxu0 0.0
    %316 = vmatprep.subr.mxu0 0.0
    %317 = vmatpush1.xpose.msra.mxu0 0.0
    %318 = vmatprep.subr.mxu0 0.0
    %319 = vmatpush1.xpose.msra.mxu0 0.0
    %320 = vmatprep.subr.mxu0 0.0
    %321 = vmatpush1.xpose.msra.mxu0 0.0
    %322 = vmatprep.subr.mxu0 0.0
    %323 = vmatpush1.xpose.msra.mxu0 0.0
    %324 = vmatprep.subr.mxu0 0.0
    %325 = vmatpush1.xpose.msra.mxu0 0.0
    %326 = vmatprep.subr.mxu0 0.0
    %327 = vmatpush1.xpose.msra.mxu0 0.0
    %328 = vmatprep.subr.mxu0 0.0
    %329 = vmatpush1.xpose.msra.mxu0 0.0
    %330 = vmatprep.subr.mxu0 0.0
    %331 = vmatpush1.xpose.msra.mxu0 0.0
    %332 = vmatprep.subr.mxu0 0.0
    %333 = vmatpush1.xpose.msra.mxu0 0.0
    %334 = vmatprep.subr.mxu0 0.0
    %335 = vmatpush1.xpose.msra.mxu0 0.0
    %336 = vmatprep.subr.mxu0 0.0
    %337 = vmatpush1.xpose.msra.mxu0 0.0
    %338 = vmatprep.mubr.f32.mxu0 %v123
    %339 = vmatmul.mubr.f32.gmra.mrb[0].mxu0 %v122
    %v340 = vpop.f32.mrb[0].mxu0
    %v341 = vadd.f32 %v271, %v340
    %v342 = vpop.f32.mrb[0].mxu0
    %343 = vdwg.mxu0
    %344 = vmatprep.subr.mxu0 %v30
    %345 = vmatpush1.xpose.msra.mxu0 %v29
    %346 = vmatprep.subr.mxu0 %v38
    %347 = vmatpush1.xpose.msra.mxu0 %v37
    %348 = vmatprep.subr.mxu0 0.0
    %349 = vmatpush1.xpose.msra.mxu0 0.0
    %350 = vmatprep.subr.mxu0 0.0
    %351 = vmatpush1.xpose.msra.mxu0 0.0
    %352 = vmatprep.subr.mxu0 0.0
    %353 = vmatpush1.xpose.msra.mxu0 0.0
    %354 = vmatprep.subr.mxu0 0.0
    %355 = vmatpush1.xpose.msra.mxu0 0.0
    %356 = vmatprep.subr.mxu0 0.0
    %357 = vmatpush1.xpose.msra.mxu0 0.0
    %358 = vmatprep.subr.mxu0 0.0
    %359 = vmatpush1.xpose.msra.mxu0 0.0
    %360 = vmatprep.subr.mxu0 0.0
    %361 = vmatpush1.xpose.msra.mxu0 0.0
    %362 = vmatprep.subr.mxu0 0.0
    %363 = vmatpush1.xpose.msra.mxu0 0.0
    %364 = vmatprep.subr.mxu0 0.0
    %365 = vmatpush1.xpose.msra.mxu0 0.0
    %366 = vmatprep.subr.mxu0 0.0
    %367 = vmatpush1.xpose.msra.mxu0 0.0
    %368 = vmatprep.subr.mxu0 0.0
    %369 = vmatpush1.xpose.msra.mxu0 0.0
    %370 = vmatprep.subr.mxu0 0.0
    %371 = vmatpush1.xpose.msra.mxu0 0.0
    %372 = vmatprep.subr.mxu0 0.0
    %373 = vmatpush1.xpose.msra.mxu0 0.0
    %374 = vmatprep.subr.mxu0 0.0
    %375 = vmatpush1.xpose.msra.mxu0 0.0
    %376 = vmatprep.subr.mxu0 0.0
    %377 = vmatpush1.xpose.msra.mxu0 0.0
    %378 = vmatprep.subr.mxu0 0.0
    %379 = vmatpush1.xpose.msra.mxu0 0.0
    %380 = vmatprep.subr.mxu0 0.0
    %381 = vmatpush1.xpose.msra.mxu0 0.0
    %382 = vmatprep.subr.mxu0 0.0
    %383 = vmatpush1.xpose.msra.mxu0 0.0
    %384 = vmatprep.subr.mxu0 0.0
    %385 = vmatpush1.xpose.msra.mxu0 0.0
    %386 = vmatprep.subr.mxu0 0.0
    %387 = vmatpush1.xpose.msra.mxu0 0.0
    %388 = vmatprep.subr.mxu0 0.0
    %389 = vmatpush1.xpose.msra.mxu0 0.0
    %390 = vmatprep.subr.mxu0 0.0
    %391 = vmatpush1.xpose.msra.mxu0 0.0
    %392 = vmatprep.subr.mxu0 0.0
    %393 = vmatpush1.xpose.msra.mxu0 0.0
    %394 = vmatprep.subr.mxu0 0.0
    %395 = vmatpush1.xpose.msra.mxu0 0.0
    %396 = vmatprep.subr.mxu0 0.0
    %397 = vmatpush1.xpose.msra.mxu0 0.0
    %398 = vmatprep.subr.mxu0 0.0
    %399 = vmatpush1.xpose.msra.mxu0 0.0
    %400 = vmatprep.subr.mxu0 0.0
    %401 = vmatpush1.xpose.msra.mxu0 0.0
    %402 = vmatprep.subr.mxu0 0.0
    %403 = vmatpush1.xpose.msra.mxu0 0.0
    %404 = vmatprep.subr.mxu0 0.0
    %405 = vmatpush1.xpose.msra.mxu0 0.0
    %406 = vmatprep.subr.mxu0 0.0
    %407 = vmatpush1.xpose.msra.mxu0 0.0
    %408 = vmatprep.mubr.f32.mxu0 %v125
    %409 = vmatmul.mubr.f32.gmra.mrb[0].mxu0 %v124
    %v410 = vpop.f32.mrb[0].mxu0
    %v411 = vadd.f32 %v341, %v410
    %v412 = vpop.f32.mrb[0].mxu0
    %413 = vdwg.mxu0
    %vm414 = vcmask 80896
    %415 = vst.msk [vmem:[#allocation2] sm:$0xff] %vm414, %v411
    // Predicated region
    $region14: #{linear_net_forward.1} parent=1 // pred_check
      _
    $region15: #{linear_net_forward.1} parent=1 // pred_check_branch
      %417 = sbr.rel (0) target = $region17
    $region16: #{linear_net_forward.1} parent=1 // pred_region
      %s419 = ssub.s32 128, 32
      %420 = vsyncadd [#allocation3], %s419
      %s421 = sshll.u32 [#allocation2], 4
      %s422 = int_to_ptr.vmem [resolvable:$true] %s421
      %427 = dma.vmem_to_hbm [thread:$0]  %s422, 32, %s3, [#allocation3], 32, 32, 2
    $region17: #{linear_net_forward.1} parent=1 // pred_fallthru
      _
    // Predicated region
    $region18: #{linear_net_forward.1} parent=1 // pred_check
      _
    $region19: #{linear_net_forward.1} parent=1 // pred_check_branch
      %429 = sbr.rel (0) target = $region21
    $region20: #{linear_net_forward.1} parent=1 // pred_region
      %430 = dma.done [#allocation3], 128
    $region21: #{linear_net_forward.1} parent=1 // pred_fallthru
      _
    %431 = vsyncpa [#allocation3], 1

</llo_original>
